<compile_context>
chip_gen: v6e
topology: v6e:2x2x1
jax: 0.10.0
libtpu: 0.0.40
codegen_flags: <defaults>
</compile_context>

<pallas_src>
import functools

import jax
import jax.numpy as jnp
import numpy as np
from jax import lax
from jax.experimental import pallas as pl
from jax.experimental.pallas import tpu as pltpu


# -----------------------------------------------------------------------------
# Pallas kernel: one (batch image, query tile) cell of the PatchNCE loss
# -----------------------------------------------------------------------------
def _patch_nce_kernel(q_ref, kt_ref, out_ref, *, inv_t, npatches, tq):
    i = pl.program_id(1)                         # query-tile index within the image

    # Fold 1/T into the (TQ, D) query tile once (D << P, so this replaces the
    # (TQ, P) VPU scaling of the logits).  Stays bf16 for the MXU.
    q = q_ref[0] * inv_t                         # (TQ, D)  bf16
    kt = kt_ref[0]                               # (D,  P)  bf16, pre-transposed keys

    # All pairwise similarities of this query tile vs. every patch of the image.
    # bf16 x bf16 -> f32 accumulation on the MXU; logits are already divided by T.
    s = jnp.dot(q, kt, preferred_element_type=jnp.float32)          # (TQ, P) f32

    # Diagonal mask from a sublane iota vs a lane iota (low vreg footprint).
    row = i * tq + lax.broadcasted_iota(jnp.int32, (tq, 1), 0)      # (TQ, 1)
    col = lax.broadcasted_iota(jnp.int32, (1, npatches), 1)         # (1,  P)
    is_diag = row == col                                            # (TQ, P)

    # Positive logit = diagonal of S (extract BEFORE masking; already scaled by 1/T).
    logit_pos = jnp.sum(jnp.where(is_diag, s, 0.0), axis=1, keepdims=True)   # (TQ, 1)

    # Negatives: masked_fill_(diag, -10.0) happened before /T in PyTorch, so the
    # masked value in scaled units is -10/T.  Overwrite s in place (keeps live set small).
    s = jnp.where(is_diag, -10.0 * inv_t, s)                                  # (TQ, P)

    # CrossEntropy(target=0, reduction='none') == logsumexp(all logits) - logit_pos
    m = jnp.maximum(logit_pos, jnp.max(s, axis=1, keepdims=True))
    sum_exp = jnp.exp(logit_pos - m) + jnp.sum(jnp.exp(s - m), axis=1, keepdims=True)
    loss = (m + jnp.log(sum_exp)) - logit_pos                                 # (TQ, 1)

    # Lane-dense store: one contiguous (1, TQ) f32 row per grid step.
    out_ref[...] = jnp.transpose(loss, (1, 0)).reshape(1, 1, tq)


# -----------------------------------------------------------------------------
# Wrapper
# -----------------------------------------------------------------------------
def _pick_query_tile(p, b):
    """Query-tile size: multiple of 8 dividing P; capped at 64 for large P."""
    cands = (64, 32, 16, 8) if p >= 256 else (128, 64, 32, 16, 8)
    tq = p                                   # fallback: full-row block (always legal)
    for cand in cands:
        if p % cand == 0:
            tq = cand
            break
    # v7x megacore: make sure both TensorCores get at least one parallel cell.
    if b * (p // tq) < 2 and tq % 16 == 0:
        tq //= 2
    return tq


def patch_nce_loss(feat_q, feat_k, *, batch_size, nce_T):
    """Per-patch PatchNCE loss, shape (N,) with N = feat_q.shape[0] = B * P."""
    n, dim = feat_q.shape
    b = batch_size
    assert n % b == 0, "number of patches must be divisible by batch_size"
    p = n // b

    # bf16 operands for the MXU and for halved HBM traffic (no-op if already bf16).
    q = feat_q.reshape(b, p, dim).astype(jnp.bfloat16)                    # (B, P, D)
    # Pre-transpose keys in the wrapper -> natural MXU layout in the kernel.
    kt = jnp.transpose(feat_k.reshape(b, p, dim), (0, 2, 1)).astype(jnp.bfloat16)  # (B, D, P)

    tq = _pick_query_tile(p, b)
    nqt = p // tq

    # VMEM budget: double-buffered bf16 input blocks, double-buffered padded f32
    # output rows, plus a few (TQ, P) f32 intermediates.  Clamp well below the
    # 64 MiB/TC budget of v7x (real footprint is typically < 1 MiB).
    lanes_p = max(p, 128)
    bytes_in = 2 * 2 * (tq * dim + dim * p)          # 2 buffers x bf16 blocks
    bytes_out = 2 * 4 * 8 * max(tq, 128)             # 2 buffers x padded f32 row tile
    bytes_tmp = 6 * 4 * tq * lanes_p                 # s / mask / exp live set (f32)
    footprint = bytes_in + bytes_out + bytes_tmp
    vmem_limit = int(min(48 * 1024 * 1024, max(8 * 1024 * 1024, 2 * footprint)))

    cost = pl.CostEstimate(
        flops=2 * n * p * dim,                        # the single MXU matmul
        transcendentals=n * (p + 2),                  # exp per logit + log per row
        bytes_accessed=2 * (2 * n * dim) + 4 * n,     # bf16 q + bf16 k^T + f32 loss
    )

    out = pl.pallas_call(
        functools.partial(_patch_nce_kernel, inv_t=1.0 / float(nce_T),
                          npatches=p, tq=tq),
        out_shape=jax.ShapeDtypeStruct((b * nqt, 1, tq), jnp.float32),
        grid_spec=pltpu.PrefetchScalarGridSpec(
            num_scalar_prefetch=0,
            # batch OUTER, query tiles INNER: kt's block index depends only on bi,
            # so the pipeline fetches the (1, D, P) keys once per image and reuses
            # it across all query tiles (do NOT reorder this grid).
            grid=(b, nqt),
            in_specs=[
                pl.BlockSpec((1, tq, dim), lambda bi, qi: (bi, qi, 0)),   # queries
                pl.BlockSpec((1, dim, p), lambda bi, qi: (bi, 0, 0)),     # keys^T
            ],
            out_specs=pl.BlockSpec((1, 1, tq),
                                   lambda bi, qi: (bi * nqt + qi, 0, 0)),
        ),
        compiler_params=pltpu.CompilerParams(
            dimension_semantics=("parallel", "parallel"),
            vmem_limit_bytes=vmem_limit,
        ),
        cost_estimate=cost,
    )(q, kt)
    return out.reshape(n)


# -----------------------------------------------------------------------------
# Pure-JAX reference mirroring the PyTorch module line-by-line (f32, HIGHEST)
# -----------------------------------------------------------------------------
def _ref_patch_nce_loss(feat_q, feat_k, *, batch_size, nce_T):
    n, dim = feat_q.shape
    # feat_k.detach(): forward value unchanged (no grad taken here).
    l_pos = jnp.sum(feat_q * feat_k, axis=1, keepdims=True)               # (N, 1)
    q = feat_q.reshape(batch_size, -1, dim)
    k = feat_k.reshape(batch_size, -1, dim)
    p = q.shape[1]
    l_neg = jnp.einsum("bpd,bqd->bpq", q, k,
                       precision=lax.Precision.HIGHEST)                   # (B, P, P)
    eye = jnp.eye(p, dtype=bool)[None, :, :]
    l_neg = jnp.where(eye, -10.0, l_neg).reshape(-1, p)                   # (N, P)
    out = jnp.concatenate([l_pos, l_neg], axis=1) / nce_T                 # (N, 1+P)
    lse = jax.scipy.special.logsumexp(out, axis=1)
    return lse - out[:, 0]                                                # CE, target 0


# -----------------------------------------------------------------------------
if __name__ == "__main__":
    key = jax.random.PRNGKey(0)
    kq, kk = jax.random.split(key)

    # Small shapes: batch_size=2 images, 128 patches each, feature dim 64.
    B = 2
    P = 128
    D = 64
    NCE_T = 0.07
    N = B * P

    feat_q = jax.random.normal(kq, (N, D), jnp.float32)
    feat_k = jax.random.normal(kk, (N, D), jnp.float32)
    # PatchNCE features are L2-normalized upstream in CUT-style pipelines.
    feat_q = feat_q / jnp.linalg.norm(feat_q, axis=1, keepdims=True)
    feat_k = feat_k / jnp.linalg.norm(feat_k, axis=1, keepdims=True)

    loss = patch_nce_loss(feat_q, feat_k, batch_size=B, nce_T=NCE_T)
    loss = jax.block_until_ready(loss)

    loss_ref = _ref_patch_nce_loss(feat_q, feat_k, batch_size=B, nce_T=NCE_T)
    loss_ref = jax.block_until_ready(loss_ref)

    assert loss.shape == (N,), f"bad output shape {loss.shape}"
    # bf16 MXU operands vs the f32 HIGHEST reference -> slightly looser tolerance.
    assert np.allclose(np.asarray(loss), np.asarray(loss_ref),
                       rtol=2e-2, atol=3e-2), (
        "mismatch: max abs diff = "
        f"{float(jnp.max(jnp.abs(loss - loss_ref)))}"
    )
    print("KERNEL_OK")
</pallas_src>

<mosaic_0001>
module attributes {stable_mosaic.version = 11 : i64} {
  func.func @_patch_nce_kernel(%arg0: i32, %arg1: i32, %arg2: memref<1x128x64xbf16, #tpu.memory_space<vmem>>, %arg3: memref<1x64x128xbf16, #tpu.memory_space<vmem>>, %arg4: memref<1x1x128xf32, #tpu.memory_space<vmem>>) attributes {dimension_semantics = [#tpu.dimension_semantics<parallel>, #tpu.dimension_semantics<parallel>], iteration_bounds = array<i64: 2, 1>, scalar_prefetch = 0 : i64, scratch_operands = 0 : i64, tpu.core_type = #tpu.core_type<tc>, window_params = [{transform_indices = @transform_0, window_bounds = array<i64: 1, 128, 64>}, {transform_indices = @transform_1, window_bounds = array<i64: 1, 64, 128>}, {transform_indices = @transform_2, window_bounds = array<i64: 1, 1, 128>}]} {
    %c0 = arith.constant 0 : index
    %c0_0 = arith.constant 0 : index
    %c0_1 = arith.constant 0 : index
    %0 = vector.load %arg2[%c0, %c0_0, %c0_1] : memref<1x128x64xbf16, #tpu.memory_space<vmem>>, vector<1x128x64xbf16>
    %1 = vector.shape_cast %0 : vector<1x128x64xbf16> to vector<128x64xbf16>
    %cst = arith.constant 1.431250e+01 : bf16
    %2 = vector.broadcast %cst : bf16 to vector<128x64xbf16>
    %3 = arith.mulf %1, %2 : vector<128x64xbf16>
    %c0_2 = arith.constant 0 : index
    %c0_3 = arith.constant 0 : index
    %c0_4 = arith.constant 0 : index
    %4 = vector.load %arg3[%c0_2, %c0_3, %c0_4] : memref<1x64x128xbf16, #tpu.memory_space<vmem>>, vector<1x64x128xbf16>
    %5 = vector.shape_cast %4 : vector<1x64x128xbf16> to vector<64x128xbf16>
    %cst_5 = arith.constant dense<0.000000e+00> : vector<128x128xf32>
    %6 = tpu.matmul %3, %5, %cst_5 {dimension_numbers = #tpu.dot_dimension_numbers<[1], [0], [0], [1], [0, 0, 1, 1], [], []>} : vector<128x64xbf16>, vector<64x128xbf16>, vector<128x128xf32> -> vector<128x128xf32>
    %c128_i32 = arith.constant 128 : i32
    %7 = arith.muli %arg1, %c128_i32 : i32
    %8 = tpu.iota {dimensions = array<i32: 0>} : vector<128x1xi32>
    %9 = vector.broadcast %7 : i32 to vector<128x1xi32>
    %10 = arith.addi %9, %8 : vector<128x1xi32>
    %11 = tpu.iota {dimensions = array<i32: 1>} : vector<1x128xi32>
    %12 = vector.broadcast %10 : vector<128x1xi32> to vector<128x128xi32>
    %13 = vector.broadcast %11 : vector<1x128xi32> to vector<128x128xi32>
    %14 = arith.cmpi eq, %12, %13 : vector<128x128xi32>
    %cst_6 = arith.constant 0.000000e+00 : f32
    %15 = vector.broadcast %cst_6 : f32 to vector<128x128xf32>
    %16 = arith.select %14, %6, %15 : vector<128x128xi1>, vector<128x128xf32>
    %cst_7 = arith.constant dense<0.000000e+00> : vector<128xf32>
    %17 = vector.multi_reduction <add>, %16, %cst_7 [1] : vector<128x128xf32> to vector<128xf32>
    %18 = vector.shape_cast %17 : vector<128xf32> to vector<128x1xf32>
    %cst_8 = arith.constant -142.857147 : f32
    %19 = vector.broadcast %cst_8 : f32 to vector<128x128xf32>
    %20 = arith.select %14, %19, %6 : vector<128x128xi1>, vector<128x128xf32>
    %cst_9 = arith.constant dense<0xFF800000> : vector<128xf32>
    %21 = vector.multi_reduction <maximumf>, %20, %cst_9 [1] : vector<128x128xf32> to vector<128xf32>
    %22 = vector.shape_cast %21 : vector<128xf32> to vector<128x1xf32>
    %23 = arith.maximumf %18, %22 : vector<128x1xf32>
    %24 = arith.subf %18, %23 : vector<128x1xf32>
    %25 = math.exp %24 : vector<128x1xf32>
    %26 = vector.broadcast %23 : vector<128x1xf32> to vector<128x128xf32>
    %27 = arith.subf %20, %26 : vector<128x128xf32>
    %28 = math.exp %27 : vector<128x128xf32>
    %cst_10 = arith.constant dense<0.000000e+00> : vector<128xf32>
    %29 = vector.multi_reduction <add>, %28, %cst_10 [1] : vector<128x128xf32> to vector<128xf32>
    %30 = vector.shape_cast %29 : vector<128xf32> to vector<128x1xf32>
    %31 = arith.addf %25, %30 : vector<128x1xf32>
    %32 = math.log %31 : vector<128x1xf32>
    %33 = arith.addf %23, %32 : vector<128x1xf32>
    %34 = arith.subf %33, %18 : vector<128x1xf32>
    %35 = tpu.transpose %34, [1, 0] : vector<128x1xf32> -> vector<1x128xf32>
    %36 = vector.shape_cast %35 : vector<1x128xf32> to vector<1x1x128xf32>
    %c0_11 = arith.constant 0 : index
    %c0_12 = arith.constant 0 : index
    %c0_13 = arith.constant 0 : index
    %37 = vector.load %arg4[%c0_11, %c0_12, %c0_13] : memref<1x1x128xf32, #tpu.memory_space<vmem>>, vector<1x1x128xf32>
    tpu.vector_store %arg4[%c0_11, %c0_12, %c0_13], %36 {strides = array<i32>} : memref<1x1x128xf32, #tpu.memory_space<vmem>>, vector<1x1x128xf32>,
    return
  }
  func.func @transform_0(%arg0: i32, %arg1: i32) -> (i32, i32, i32) {
    %c0_i32 = arith.constant 0 : i32
    %c0_i32_0 = arith.constant 0 : i32
    return %arg0, %arg1, %c0_i32 : i32, i32, i32
  }
  func.func @transform_1(%arg0: i32, %arg1: i32) -> (i32, i32, i32) {
    %c0_i32 = arith.constant 0 : i32
    %c0_i32_0 = arith.constant 0 : i32
    %c0_i32_1 = arith.constant 0 : i32
    return %arg0, %c0_i32, %c0_i32_0 : i32, i32, i32
  }
  func.func @transform_2(%arg0: i32, %arg1: i32) -> (i32, i32, i32) {
    %c1_i32 = arith.constant 1 : i32
    %0 = arith.muli %arg0, %c1_i32 : i32
    %1 = arith.addi %0, %arg1 : i32
    %c0_i32 = arith.constant 0 : i32
    %c0_i32_0 = arith.constant 0 : i32
    %c0_i32_1 = arith.constant 0 : i32
    return %1, %c0_i32, %c0_i32_0 : i32, i32, i32
  }
}

</mosaic_0001>

<llo_original>
// kernel: tpu_custom_call.1
$region0: #{tpu_custom_call.1}
  #allocation0 [shape = 'u32[]', space=smem, size = 0x4, offset = 0x4, fixed_abs, tag = 'smem constant byte address 0x4 - core index']
  #allocation1 [shape = 'u32[144,128]{1,0:T(1,128)}', space=vmem, size = 0x12000, scoped, tag = 'internal scratch']
  %s0 = inlined_call_operand.vmem [shape: bf16[2,128,64], index: 0, kind: input, shape index: {}]
  %s1 = inlined_call_operand.vmem [shape: bf16[2,64,128], index: 1, kind: input, shape index: {}]
  %s2 = inlined_call_operand.hbm [shape: f32[2,1,128], index: 2, kind: output, shape index: {}]
  %s3 = sld [smem:[#allocation0]]
  $region41: #{tpu_custom_call.1} parent=0
    _
  %s5 = ssub.s32 1, %s3
  %s6 = scalar_select 0, %s5, %s3
  $region1: #{tpu_custom_call.1} parent=0
    #allocation2 [shape = 'u8[1024]{0}', space=vmem, size = 0x400, scoped, tag = 'output window, operand 0']
    #allocation3 [shape = 's32[2]{0}', space=sflag, size = 0x8, scoped, tag = 'scoped memory for tpu_custom_call.1']
    %7 = vsyncpa [#allocation3], 0
    %s8 = scalar_lea.sflag [#allocation3], 1
    %9 = vsyncpa %s8, 0
    loop: start=0, step=1, limit=4
    $region2: #{tpu_custom_call.1} parent=1 // loop_pre_header
      _
    $region3: #{tpu_custom_call.1} parent=1 // loop_header
      %s11 = sphi 0, %s15
      %p12 = scmp.ge.s32.totalorder %s11, 4
      %s18 = sphi 0, %s30
      %s19 = sphi 0, %s26
      %s20 = sphi 0, %s18
      %s21 = sphi 0, %s19
      %s22 = sphi 0, %s20
      %s23 = sphi 0, %s21
      %s35 = sphi 0, %s37
      %s38 = sphi 0, %s35
      %s39 = sphi 0, %s38
      %s55 = sphi 0, %s39
      %s61 = sphi 0, %s63
      %s64 = sphi 0, %s61
      %s65 = sphi 0, %s64
      %s81 = sphi 0, %s65
      %s89 = sphi 0, %s91
      %s92 = sphi 0, %s89
      %s93 = sphi 0, %s92
      %s109 = sphi 0, %s93
    $region4: #{tpu_custom_call.1} parent=1 // loop_header_branch
      %14 = sbr.rel (%p12) target = $region8
    $region5: #{tpu_custom_call.1} parent=1 // loop_body
      %s16 = ssub.s32 %s11, 1
      %s17 = ssub.s32 %s11, 2
      %s24 = sadd.s32 1, %s19
      %p25 = scmp.ge.s32.totalorder %s24, 1
      %s26 = scalar_select %p25, 0, %s24
      %s27 = sadd.s32 1, %s18
      %s28 = scalar_select %p25, %s27, %s18
      %p29 = scmp.ge.s32.totalorder %s28, 2
      %s30 = scalar_select %p29, 0, %s28
      %s31 = ssub.s32 %s18, %s30
      %s32 = ssub.s32 %s19, %s26
      %s33 = sor.u32 %s31, %s32
      %p34 = scmp.eq.s32.totalorder %s33, 0
      %s36 = sadd.s32 %s35, 1
      %s37 = scalar_select %p34, %s35, %s36
      %p40 = pneg %p34
      %p41 = scmp.eq.s32.totalorder %s11, 1
      %p42 = por %p40, %p41
      %p43 = scmp.ne.s32.totalorder %s35, %s38
      %p44 = scmp.eq.s32.totalorder %s11, 0
      %p45 = por %p43, %p44
      %p46 = scmp.ne.s32.totalorder %s35, %s38
      %p47 = scmp.eq.s32.totalorder %s16, 1
      %p48 = por %p46, %p47
      %p49 = scmp.ne.s32.totalorder %s38, %s39
      %p50 = scmp.eq.s32.totalorder %s16, 0
      %p51 = por %p49, %p50
      %p52 = scmp.ne.s32.totalorder %s38, %s39
      %p53 = scmp.eq.s32.totalorder %s17, 1
      %p54 = por %p52, %p53
      %p56 = scmp.ne.s32.totalorder %s39, %s55
      %p57 = scmp.eq.s32.totalorder %s17, 0
      %p58 = por %p56, %p57
      %s59 = ssub.s32 %s18, %s30
      %p60 = scmp.eq.s32.totalorder %s59, 0
      %s62 = sadd.s32 %s61, 1
      %s63 = scalar_select %p60, %s61, %s62
      %p66 = pneg %p60
      %p67 = scmp.eq.s32.totalorder %s11, 1
      %p68 = por %p66, %p67
      %p69 = scmp.ne.s32.totalorder %s61, %s64
      %p70 = scmp.eq.s32.totalorder %s11, 0
      %p71 = por %p69, %p70
      %p72 = scmp.ne.s32.totalorder %s61, %s64
      %p73 = scmp.eq.s32.totalorder %s16, 1
      %p74 = por %p72, %p73
      %p75 = scmp.ne.s32.totalorder %s64, %s65
      %p76 = scmp.eq.s32.totalorder %s16, 0
      %p77 = por %p75, %p76
      %p78 = scmp.ne.s32.totalorder %s64, %s65
      %p79 = scmp.eq.s32.totalorder %s17, 1
      %p80 = por %p78, %p79
      %p82 = scmp.ne.s32.totalorder %s65, %s81
      %p83 = scmp.eq.s32.totalorder %s17, 0
      %p84 = por %p82, %p83
      %s85 = sadd.s32 %s18, %s19
      %s86 = sadd.s32 %s30, %s26
      %s87 = ssub.s32 %s85, %s86
      %p88 = scmp.eq.s32.totalorder %s87, 0
      %s90 = sadd.s32 %s89, 1
      %s91 = scalar_select %p88, %s89, %s90
      %p94 = pneg %p88
      %p95 = scmp.eq.s32.totalorder %s11, 1
      %p96 = por %p94, %p95
      %p97 = scmp.ne.s32.totalorder %s89, %s92
      %p98 = scmp.eq.s32.totalorder %s11, 0
      %p99 = por %p97, %p98
      %p100 = scmp.ne.s32.totalorder %s89, %s92
      %p101 = scmp.eq.s32.totalorder %s16, 1
      %p102 = por %p100, %p101
      %p103 = scmp.ne.s32.totalorder %s92, %s93
      %p104 = scmp.eq.s32.totalorder %s16, 0
      %p105 = por %p103, %p104
      %p106 = scmp.ne.s32.totalorder %s92, %s93
      %p107 = scmp.eq.s32.totalorder %s17, 1
      %p108 = por %p106, %p107
      %p110 = scmp.ne.s32.totalorder %s93, %s109
      %p111 = scmp.eq.s32.totalorder %s17, 0
      %p112 = por %p110, %p111
      %p113 = scmp.le.s32.totalorder 1, %s11
      %p114 = scmp.lt.s32.totalorder %s11, 3
      %p115 = pnand %p113, %p114
      %p116 = pneg %p115
      // Predicated region
      $region9: #{tpu_custom_call.1} parent=5 // pred_check
        _
      $region10: #{tpu_custom_call.1} parent=5 // pred_check_branch
        %118 = sbr.rel (%p115) target = $region12
      $region11: #{tpu_custom_call.1} parent=5 // pred_region
        %s119 = ssub.s32 %s11, 1
      $region12: #{tpu_custom_call.1} parent=5 // pred_fallthru
        _
      %p120 = scmp.lt.s32.totalorder %s11, 2
      // Predicated region
      $region13: #{tpu_custom_call.1} parent=5 // pred_check
        %p121 = pneg %p120
      $region14: #{tpu_custom_call.1} parent=5 // pred_check_branch
        %123 = sbr.rel (%p121) target = $region16
      $region15: #{tpu_custom_call.1} parent=5 // pred_region
        // Predicated region
        $region17: #{tpu_custom_call.1} parent=15 // pred_check
          %p124 = pneg %p45
        $region18: #{tpu_custom_call.1} parent=15 // pred_check_branch
          %126 = sbr.rel (%p124) target = $region20
        $region19: #{tpu_custom_call.1} parent=15 // pred_region
          %s127 = smul.u32 16, %s19
          %p128 = scmp.lt.s32.totalorder %s18, 1
          %s129 = scalar_select %p128, %s18, 1
          %p130 = scmp.lt.s32.totalorder %s127, 15
          %s131 = scalar_select %p130, %s127, 15
          %s132 = smul.addr %s129, 16
          %s133 = sadd.s32 %s131, %s132
          %s134 = smul.addr %s133, 4
          %s135 = scalar_lea.vmem %s0, %s134
          %s136 = smul.u32 16, %s19
        $region20: #{tpu_custom_call.1} parent=15 // pred_fallthru
          _
        // Predicated region
        $region21: #{tpu_custom_call.1} parent=15 // pred_check
          %p137 = pneg %p71
        $region22: #{tpu_custom_call.1} parent=15 // pred_check_branch
          %139 = sbr.rel (%p137) target = $region24
        $region23: #{tpu_custom_call.1} parent=15 // pred_region
          %p140 = scmp.lt.s32.totalorder %s18, 1
          %s141 = scalar_select %p140, %s18, 1
          %s142 = smul.addr %s141, 8
          %s143 = smul.addr %s142, 4
          %s144 = scalar_lea.vmem %s1, %s143
        $region24: #{tpu_custom_call.1} parent=15 // pred_fallthru
          _
      $region16: #{tpu_custom_call.1} parent=5 // pred_fallthru
        _
      %p145 = scmp.le.s32.totalorder 1, %s11
      %p146 = scmp.lt.s32.totalorder %s11, 3
      %p147 = pnand %p145, %p146
      %p148 = pneg %p147
      // Predicated region
      $region25: #{tpu_custom_call.1} parent=5 // pred_check
        _
      $region26: #{tpu_custom_call.1} parent=5 // pred_check_branch
        %150 = sbr.rel (%p147) target = $region28
      $region27: #{tpu_custom_call.1} parent=5 // pred_region
        %s151 = ssub.s32 %s11, 1
        %s152 = smul.u32 16, %s21
        %p153 = scmp.lt.s32.totalorder %s20, 1
        %s154 = scalar_select %p153, %s20, 1
        %p155 = scmp.lt.s32.totalorder %s152, 15
        %s156 = scalar_select %p155, %s152, 15
        %s157 = smul.addr %s154, 16
        %s158 = sadd.s32 %s156, %s157
        %s159 = smul.addr %s158, 4
        %s160 = scalar_lea.vmem %s0, %s159
        %p161 = pneg %p51
        %p162 = pneg %p48
        %p163 = scmp.lt.s32.totalorder %s20, 1
        %s164 = scalar_select %p163, %s20, 1
        %s165 = smul.addr %s164, 8
        %s166 = smul.addr %s165, 4
        %s167 = scalar_lea.vmem %s1, %s166
        %p168 = pneg %p77
        %p169 = pneg %p74
        %p170 = pneg %p105
        %p171 = pneg %p102
        %s172 = sand.u32 %s92, 1
        %s173 = scalar_lea.sflag [#allocation3], %s172
        %s174 = sand.u32 %s92, 1
        %s175 = scalar_lea.vmem [#allocation2], %s174
        %s176 = smul.u32 16, %s21
        %p177 = scmp.lt.s32.totalorder %s20, 1
        %s178 = scalar_select %p177, %s20, 1
        %p179 = scmp.lt.s32.totalorder %s176, 15
        %s180 = scalar_select %p179, %s176, 15
        %s181 = smul.addr %s178, 16
        %s182 = sadd.s32 %s180, %s181
        %s183 = smul.addr %s182, 4
        %s184 = scalar_lea.vmem %s0, %s183
        %s185 = smul.u32 16, %s21
        %p186 = scmp.lt.s32.totalorder %s20, 1
        %s187 = scalar_select %p186, %s20, 1
        %s188 = smul.addr %s187, 8
        %s189 = smul.addr %s188, 4
        %s190 = scalar_lea.vmem %s1, %s189
        %s191 = sadd.s32 %s20, %s21
        %v194 = vld [vmem:[%s184] sm:$0xf]
        %v195 = vld [vmem:[%s184 + $0x4] sm:$0xf]
        %v196 = vld [vmem:[%s184 + $0x8] sm:$0xf]
        %v197 = vld [vmem:[%s184 + $0xc] sm:$0xf]
        %v198 = vld [vmem:[%s184 + $0x10] sm:$0xf]
        %v199 = vld [vmem:[%s184 + $0x14] sm:$0xf]
        %v200 = vld [vmem:[%s184 + $0x18] sm:$0xf]
        %v201 = vld [vmem:[%s184 + $0x1c] sm:$0xf]
        %v202 = vld [vmem:[%s184 + $0x20] sm:$0xf]
        %v203 = vld [vmem:[%s184 + $0x24] sm:$0xf]
        %v204 = vld [vmem:[%s184 + $0x28] sm:$0xf]
        %v205 = vld [vmem:[%s184 + $0x2c] sm:$0xf]
        %v206 = vld [vmem:[%s184 + $0x30] sm:$0xf]
        %v207 = vld [vmem:[%s184 + $0x34] sm:$0xf]
        %v208 = vld [vmem:[%s184 + $0x38] sm:$0xf]
        %v209 = vld [vmem:[%s184 + $0x3c] sm:$0xf]
        %v210 = vmul.bf16 %v194, 1097154917
        %v211 = vmul.bf16 %v195, 1097154917
        %v212 = vmul.bf16 %v196, 1097154917
        %v213 = vmul.bf16 %v197, 1097154917
        %v214 = vmul.bf16 %v198, 1097154917
        %v215 = vmul.bf16 %v199, 1097154917
        %v216 = vmul.bf16 %v200, 1097154917
        %v217 = vmul.bf16 %v201, 1097154917
        %v218 = vmul.bf16 %v202, 1097154917
        %v219 = vmul.bf16 %v203, 1097154917
        %v220 = vmul.bf16 %v204, 1097154917
        %v221 = vmul.bf16 %v205, 1097154917
        %v222 = vmul.bf16 %v206, 1097154917
        %v223 = vmul.bf16 %v207, 1097154917
        %v224 = vmul.bf16 %v208, 1097154917
        %v225 = vmul.bf16 %v209, 1097154917
        %v226 = vld [vmem:[%s190] sm:$0xf]
        %v227 = vld [vmem:[%s190 + $0x4] sm:$0xf]
        %v228 = vld [vmem:[%s190 + $0x8] sm:$0xf]
        %v229 = vld [vmem:[%s190 + $0xc] sm:$0xf]
        %v230 = vld [vmem:[%s190 + $0x10] sm:$0xf]
        %v231 = vld [vmem:[%s190 + $0x14] sm:$0xf]
        %v232 = vld [vmem:[%s190 + $0x18] sm:$0xf]
        %v233 = vld [vmem:[%s190 + $0x1c] sm:$0xf]
        %v250 = vunpack.c.l.b16 %v210
        %v251 = vunpack.c.l.b16 %v211
        %v252 = vunpack.c.l.b16 %v212
        %v253 = vunpack.c.l.b16 %v213
        %v254 = vunpack.c.l.b16 %v214
        %v255 = vunpack.c.l.b16 %v215
        %v256 = vunpack.c.l.b16 %v216
        %v257 = vunpack.c.l.b16 %v217
        %v258 = vunpack.c.l.b16 %v218
        %v259 = vunpack.c.l.b16 %v219
        %v260 = vunpack.c.l.b16 %v220
        %v261 = vunpack.c.l.b16 %v221
        %v262 = vunpack.c.l.b16 %v222
        %v263 = vunpack.c.l.b16 %v223
        %v264 = vunpack.c.l.b16 %v224
        %v265 = vunpack.c.l.b16 %v225
        %v266 = vpack.c.b16 %v251, %v250
        %v267 = vpack.c.b16 %v253, %v252
        %v268 = vpack.c.b16 %v255, %v254
        %v269 = vpack.c.b16 %v257, %v256
        %v270 = vpack.c.b16 %v259, %v258
        %v271 = vpack.c.b16 %v261, %v260
        %v272 = vpack.c.b16 %v263, %v262
        %v273 = vpack.c.b16 %v265, %v264
        %v282 = vunpack.c.l.b16 %v226
        %v283 = vunpack.c.l.b16 %v227
        %v284 = vunpack.c.l.b16 %v228
        %v285 = vunpack.c.l.b16 %v229
        %v286 = vunpack.c.l.b16 %v230
        %v287 = vunpack.c.l.b16 %v231
        %v288 = vunpack.c.l.b16 %v232
        %v289 = vunpack.c.l.b16 %v233
        %v290 = vpack.c.b16 %v283, %v282
        %v291 = vpack.c.b16 %v285, %v284
        %v292 = vpack.c.b16 %v287, %v286
        %v293 = vpack.c.b16 %v289, %v288
        %vm298 = vcmask 523264
        %v300 = vsel %vm298, %v266, 0
        %v303 = vsel %vm298, %v267, 0
        %v306 = vsel %vm298, %v268, 0
        %v309 = vsel %vm298, %v269, 0
        %v312 = vsel %vm298, %v270, 0
        %v315 = vsel %vm298, %v271, 0
        %v318 = vsel %vm298, %v272, 0
        %v321 = vsel %vm298, %v273, 0
        %323 = vmatprep.subr.bf16.mxu0 0
        %324 = vmatpush1.bf16.msra.mxu0 0
        %325 = vmatprep.subr.bf16.mxu0 0
        %326 = vmatpush1.bf16.msra.mxu0 0
        %327 = vmatprep.subr.bf16.mxu0 0
        %328 = vmatpush1.bf16.msra.mxu0 0
        %329 = vmatprep.subr.bf16.mxu0 0
        %330 = vmatpush1.bf16.msra.mxu0 0
        %331 = vmatprep.subr.bf16.mxu0 0
        %332 = vmatpush1.bf16.msra.mxu0 %v293
        %333 = vmatprep.subr.bf16.mxu0 0
        %334 = vmatpush1.bf16.msra.mxu0 %v292
        %335 = vmatprep.subr.bf16.mxu0 0
        %336 = vmatpush1.bf16.msra.mxu0 %v291
        %337 = vmatprep.subr.bf16.mxu0 0
        %338 = vmatpush1.bf16.msra.mxu0 %v290
        %339 = vmatprep.subr.bf16.mxu0 0
        %340 = vmatpush2.bf16.msra.mxu0 0
        %341 = vmatprep.subr.bf16.mxu0 0
        %342 = vmatpush2.bf16.msra.mxu0 0
        %343 = vmatprep.subr.bf16.mxu0 0
        %344 = vmatpush2.bf16.msra.mxu0 0
        %345 = vmatprep.subr.bf16.mxu0 0
        %346 = vmatpush2.bf16.msra.mxu0 0
        %347 = vmatprep.subr.bf16.mxu0 0
        %348 = vmatpush2.bf16.msra.mxu0 0
        %349 = vmatprep.subr.bf16.mxu0 0
        %350 = vmatpush2.bf16.msra.mxu0 0
        %351 = vmatprep.subr.bf16.mxu0 0
        %352 = vmatpush2.bf16.msra.mxu0 0
        %353 = vmatprep.subr.bf16.mxu0 0
        %354 = vmatpush2.bf16.msra.mxu0 0
        %355 = vmatprep.mubr.bf16.mxu0 0
        %356 = vmatmul.mubr.bf16.gmra.mxu0 %v300
        %v357 = vpop.f32.mrf.mxu0
        %v358 = vadd.f32 0.0, %v357
        %v359 = vpop.f32.mrf.mxu0
        %v360 = vpop.f32.mrf.mxu0
        %v361 = vadd.f32 0.0, %v360
        %v362 = vpop.f32.mrf.mxu0
        %363 = vmatprep.mubr.bf16.mxu0 0
        %364 = vmatmul.mubr.bf16.gmra.mxu0 %v303
        %v365 = vpop.f32.mrf.mxu0
        %v366 = vadd.f32 0.0, %v365
        %v367 = vpop.f32.mrf.mxu0
        %v368 = vpop.f32.mrf.mxu0
        %v369 = vadd.f32 0.0, %v368
        %v370 = vpop.f32.mrf.mxu0
        %371 = vmatprep.mubr.bf16.mxu0 0
        %372 = vmatmul.mubr.bf16.gmra.mxu0 %v306
        %v373 = vpop.f32.mrf.mxu0
        %v374 = vadd.f32 0.0, %v373
        %v375 = vpop.f32.mrf.mxu0
        %v376 = vpop.f32.mrf.mxu0
        %v377 = vadd.f32 0.0, %v376
        %v378 = vpop.f32.mrf.mxu0
        %379 = vmatprep.mubr.bf16.mxu0 0
        %380 = vmatmul.mubr.bf16.gmra.mxu0 %v309
        %v381 = vpop.f32.mrf.mxu0
        %v382 = vadd.f32 0.0, %v381
        %v383 = vpop.f32.mrf.mxu0
        %v384 = vpop.f32.mrf.mxu0
        %v385 = vadd.f32 0.0, %v384
        %v386 = vpop.f32.mrf.mxu0
        %387 = vmatprep.mubr.bf16.mxu0 0
        %388 = vmatmul.mubr.bf16.gmra.mxu0 %v312
        %v389 = vpop.f32.mrf.mxu0
        %v390 = vadd.f32 0.0, %v389
        %v391 = vpop.f32.mrf.mxu0
        %v392 = vpop.f32.mrf.mxu0
        %v393 = vadd.f32 0.0, %v392
        %v394 = vpop.f32.mrf.mxu0
        %395 = vmatprep.mubr.bf16.mxu0 0
        %396 = vmatmul.mubr.bf16.gmra.mxu0 %v315
        %v397 = vpop.f32.mrf.mxu0
        %v398 = vadd.f32 0.0, %v397
        %v399 = vpop.f32.mrf.mxu0
        %v400 = vpop.f32.mrf.mxu0
        %v401 = vadd.f32 0.0, %v400
        %v402 = vpop.f32.mrf.mxu0
        %403 = vmatprep.mubr.bf16.mxu0 0
        %404 = vmatmul.mubr.bf16.gmra.mxu0 %v318
        %v405 = vpop.f32.mrf.mxu0
        %v406 = vadd.f32 0.0, %v405
        %v407 = vpop.f32.mrf.mxu0
        %v408 = vpop.f32.mrf.mxu0
        %v409 = vadd.f32 0.0, %v408
        %v410 = vpop.f32.mrf.mxu0
        %411 = vmatprep.mubr.bf16.mxu0 0
        %412 = vmatmul.mubr.bf16.gmra.mxu0 %v321
        %v413 = vpop.f32.mrf.mxu0
        %v414 = vadd.f32 0.0, %v413
        %v415 = vpop.f32.mrf.mxu0
        %v416 = vpop.f32.mrf.mxu0
        %v417 = vadd.f32 0.0, %v416
        %v418 = vpop.f32.mrf.mxu0
        %419 = vdwg.mxu0
        %s420 = smul.u32 %s21, 128
        %v421 = vlaneseq
        %v422 = vshrl.u32 %v421, 7
        %v423 = vadd.s32 %v422, 8
        %v424 = vadd.s32 %v422, 16
        %v425 = vadd.s32 %v422, 24
        %v426 = vadd.s32 %v422, 32
        %v427 = vadd.s32 %v422, 40
        %v428 = vadd.s32 %v422, 48
        %v429 = vadd.s32 %v422, 56
        %v430 = vadd.s32 %v422, 64
        %v431 = vadd.s32 %v422, 72
        %v432 = vadd.s32 %v422, 80
        %v433 = vadd.s32 %v422, 88
        %v434 = vadd.s32 %v422, 96
        %v435 = vadd.s32 %v422, 104
        %v436 = vadd.s32 %v422, 112
        %v437 = vadd.s32 %v422, 120
        %v438 = vstv %s420
        %v439 = vadd.s32 %v438, %v422
        %v440 = vadd.s32 %v438, %v423
        %v441 = vadd.s32 %v438, %v424
        %v442 = vadd.s32 %v438, %v425
        %v443 = vadd.s32 %v438, %v426
        %v444 = vadd.s32 %v438, %v427
        %v445 = vadd.s32 %v438, %v428
        %v446 = vadd.s32 %v438, %v429
        %v447 = vadd.s32 %v438, %v430
        %v448 = vadd.s32 %v438, %v431
        %v449 = vadd.s32 %v438, %v432
        %v450 = vadd.s32 %v438, %v433
        %v451 = vadd.s32 %v438, %v434
        %v452 = vadd.s32 %v438, %v435
        %v453 = vadd.s32 %v438, %v436
        %v454 = vadd.s32 %v438, %v437
        %v455 = vlaneseq
        %v456 = vand.u32 %v455, 127
        %vm457 = vcmp.eq.s32.totalorder %v439, %v456
        %vm458 = vcmp.eq.s32.totalorder %v440, %v456
        %vm459 = vcmp.eq.s32.totalorder %v441, %v456
        %vm460 = vcmp.eq.s32.totalorder %v442, %v456
        %vm461 = vcmp.eq.s32.totalorder %v443, %v456
        %vm462 = vcmp.eq.s32.totalorder %v444, %v456
        %vm463 = vcmp.eq.s32.totalorder %v445, %v456
        %vm464 = vcmp.eq.s32.totalorder %v446, %v456
        %vm465 = vcmp.eq.s32.totalorder %v447, %v456
        %vm466 = vcmp.eq.s32.totalorder %v448, %v456
        %vm467 = vcmp.eq.s32.totalorder %v449, %v456
        %vm468 = vcmp.eq.s32.totalorder %v450, %v456
        %vm469 = vcmp.eq.s32.totalorder %v451, %v456
        %vm470 = vcmp.eq.s32.totalorder %v452, %v456
        %vm471 = vcmp.eq.s32.totalorder %v453, %v456
        %vm472 = vcmp.eq.s32.totalorder %v454, %v456
        %v473 = vsel %vm457, %v358, 0.0
        %v474 = vsel %vm458, %v361, 0.0
        %v475 = vsel %vm459, %v366, 0.0
        %v476 = vsel %vm460, %v369, 0.0
        %v477 = vsel %vm461, %v374, 0.0
        %v478 = vsel %vm462, %v377, 0.0
        %v479 = vsel %vm463, %v382, 0.0
        %v480 = vsel %vm464, %v385, 0.0
        %v481 = vsel %vm465, %v390, 0.0
        %v482 = vsel %vm466, %v393, 0.0
        %v483 = vsel %vm467, %v398, 0.0
        %v484 = vsel %vm468, %v401, 0.0
        %v485 = vsel %vm469, %v406, 0.0
        %v486 = vsel %vm470, %v409, 0.0
        %v487 = vsel %vm471, %v414, 0.0
        %v488 = vsel %vm472, %v417, 0.0
        %489 = vadd.xlane.f32.xlu0 %v473
        %v490 = vpop.xlane.xlu0 %489
        %491 = vadd.xlane.f32.xlu0 %v474
        %v492 = vpop.xlane.xlu0 %491
        %493 = vadd.xlane.f32.xlu0 %v475
        %v494 = vpop.xlane.xlu0 %493
        %495 = vadd.xlane.f32.xlu0 %v476
        %v496 = vpop.xlane.xlu0 %495
        %497 = vadd.xlane.f32.xlu0 %v477
        %v498 = vpop.xlane.xlu0 %497
        %499 = vadd.xlane.f32.xlu0 %v478
        %v500 = vpop.xlane.xlu0 %499
        %501 = vadd.xlane.f32.xlu0 %v479
        %v502 = vpop.xlane.xlu0 %501
        %503 = vadd.xlane.f32.xlu0 %v480
        %v504 = vpop.xlane.xlu0 %503
        %505 = vadd.xlane.f32.xlu0 %v481
        %v506 = vpop.xlane.xlu0 %505
        %507 = vadd.xlane.f32.xlu0 %v482
        %v508 = vpop.xlane.xlu0 %507
        %509 = vadd.xlane.f32.xlu0 %v483
        %v510 = vpop.xlane.xlu0 %509
        %511 = vadd.xlane.f32.xlu0 %v484
        %v512 = vpop.xlane.xlu0 %511
        %513 = vadd.xlane.f32.xlu0 %v485
        %v514 = vpop.xlane.xlu0 %513
        %515 = vadd.xlane.f32.xlu0 %v486
        %v516 = vpop.xlane.xlu0 %515
        %517 = vadd.xlane.f32.xlu0 %v487
        %v518 = vpop.xlane.xlu0 %517
        %519 = vadd.xlane.f32.xlu0 %v488
        %v520 = vpop.xlane.xlu0 %519
        %v521 = vsel %vm457, -142.85715, %v358
        %v522 = vsel %vm458, -142.85715, %v361
        %v523 = vsel %vm459, -142.85715, %v366
        %v524 = vsel %vm460, -142.85715, %v369
        %v525 = vsel %vm461, -142.85715, %v374
        %v526 = vsel %vm462, -142.85715, %v377
        %v527 = vsel %vm463, -142.85715, %v382
        %v528 = vsel %vm464, -142.85715, %v385
        %v529 = vsel %vm465, -142.85715, %v390
        %v530 = vsel %vm466, -142.85715, %v393
        %v531 = vsel %vm467, -142.85715, %v398
        %v532 = vsel %vm468, -142.85715, %v401
        %v533 = vsel %vm469, -142.85715, %v406
        %v534 = vsel %vm470, -142.85715, %v409
        %v535 = vsel %vm471, -142.85715, %v414
        %v536 = vsel %vm472, -142.85715, %v417
        %537 = vmax.xlane.f32.xlu0 %v521
        %v538 = vpop.xlane.xlu0 %537
        %539 = vmax.xlane.f32.xlu0 %v522
        %v540 = vpop.xlane.xlu0 %539
        %541 = vmax.xlane.f32.xlu0 %v523
        %v542 = vpop.xlane.xlu0 %541
        %543 = vmax.xlane.f32.xlu0 %v524
        %v544 = vpop.xlane.xlu0 %543
        %545 = vmax.xlane.f32.xlu0 %v525
        %v546 = vpop.xlane.xlu0 %545
        %547 = vmax.xlane.f32.xlu0 %v526
        %v548 = vpop.xlane.xlu0 %547
        %549 = vmax.xlane.f32.xlu0 %v527
        %v550 = vpop.xlane.xlu0 %549
        %551 = vmax.xlane.f32.xlu0 %v528
        %v552 = vpop.xlane.xlu0 %551
        %553 = vmax.xlane.f32.xlu0 %v529
        %v554 = vpop.xlane.xlu0 %553
        %555 = vmax.xlane.f32.xlu0 %v530
        %v556 = vpop.xlane.xlu0 %555
        %557 = vmax.xlane.f32.xlu0 %v531
        %v558 = vpop.xlane.xlu0 %557
        %559 = vmax.xlane.f32.xlu0 %v532
        %v560 = vpop.xlane.xlu0 %559
        %561 = vmax.xlane.f32.xlu0 %v533
        %v562 = vpop.xlane.xlu0 %561
        %563 = vmax.xlane.f32.xlu0 %v534
        %v564 = vpop.xlane.xlu0 %563
        %565 = vmax.xlane.f32.xlu0 %v535
        %v566 = vpop.xlane.xlu0 %565
        %567 = vmax.xlane.f32.xlu0 %v536
        %v568 = vpop.xlane.xlu0 %567
        %v569 = vmax.f32 %v490, %v538
        %v570 = vmax.f32 %v492, %v540
        %v571 = vmax.f32 %v494, %v542
        %v572 = vmax.f32 %v496, %v544
        %v573 = vmax.f32 %v498, %v546
        %v574 = vmax.f32 %v500, %v548
        %v575 = vmax.f32 %v502, %v550
        %v576 = vmax.f32 %v504, %v552
        %v577 = vmax.f32 %v506, %v554
        %v578 = vmax.f32 %v508, %v556
        %v579 = vmax.f32 %v510, %v558
        %v580 = vmax.f32 %v512, %v560
        %v581 = vmax.f32 %v514, %v562
        %v582 = vmax.f32 %v516, %v564
        %v583 = vmax.f32 %v518, %v566
        %v584 = vmax.f32 %v520, %v568
        %v585 = vsub.f32 %v490, %v569
        %v586 = vsub.f32 %v492, %v570
        %v587 = vsub.f32 %v494, %v571
        %v588 = vsub.f32 %v496, %v572
        %v589 = vsub.f32 %v498, %v573
        %v590 = vsub.f32 %v500, %v574
        %v591 = vsub.f32 %v502, %v575
        %v592 = vsub.f32 %v504, %v576
        %v593 = vsub.f32 %v506, %v577
        %v594 = vsub.f32 %v508, %v578
        %v595 = vsub.f32 %v510, %v579
        %v596 = vsub.f32 %v512, %v580
        %v597 = vsub.f32 %v514, %v581
        %v598 = vsub.f32 %v516, %v582
        %v599 = vsub.f32 %v518, %v583
        %v600 = vsub.f32 %v520, %v584
        %v601 = vmul.f32 %v585, 1.442695
        %v602 = vpow.pop %v601
        %v603 = vmul.f32 %v586, 1.442695
        %v604 = vpow.pop %v603
        %v605 = vmul.f32 %v587, 1.442695
        %v606 = vpow.pop %v605
        %v607 = vmul.f32 %v588, 1.442695
        %v608 = vpow.pop %v607
        %v609 = vmul.f32 %v589, 1.442695
        %v610 = vpow.pop %v609
        %v611 = vmul.f32 %v590, 1.442695
        %v612 = vpow.pop %v611
        %v613 = vmul.f32 %v591, 1.442695
        %v614 = vpow.pop %v613
        %v615 = vmul.f32 %v592, 1.442695
        %v616 = vpow.pop %v615
        %v617 = vmul.f32 %v593, 1.442695
        %v618 = vpow.pop %v617
        %v619 = vmul.f32 %v594, 1.442695
        %v620 = vpow.pop %v619
        %v621 = vmul.f32 %v595, 1.442695
        %v622 = vpow.pop %v621
        %v623 = vmul.f32 %v596, 1.442695
        %v624 = vpow.pop %v623
        %v625 = vmul.f32 %v597, 1.442695
        %v626 = vpow.pop %v625
        %v627 = vmul.f32 %v598, 1.442695
        %v628 = vpow.pop %v627
        %v629 = vmul.f32 %v599, 1.442695
        %v630 = vpow.pop %v629
        %v631 = vmul.f32 %v600, 1.442695
        %v632 = vpow.pop %v631
        %v633 = vsub.f32 %v521, %v569
        %v634 = vsub.f32 %v522, %v570
        %v635 = vsub.f32 %v523, %v571
        %v636 = vsub.f32 %v524, %v572
        %v637 = vsub.f32 %v525, %v573
        %v638 = vsub.f32 %v526, %v574
        %v639 = vsub.f32 %v527, %v575
        %v640 = vsub.f32 %v528, %v576
        %v641 = vsub.f32 %v529, %v577
        %v642 = vsub.f32 %v530, %v578
        %v643 = vsub.f32 %v531, %v579
        %v644 = vsub.f32 %v532, %v580
        %v645 = vsub.f32 %v533, %v581
        %v646 = vsub.f32 %v534, %v582
        %v647 = vsub.f32 %v535, %v583
        %v648 = vsub.f32 %v536, %v584
        %v649 = vmul.f32 %v633, 1.442695
        %v650 = vpow.pop %v649
        %v651 = vmul.f32 %v634, 1.442695
        %v652 = vpow.pop %v651
        %v653 = vmul.f32 %v635, 1.442695
        %v654 = vpow.pop %v653
        %v655 = vmul.f32 %v636, 1.442695
        %v656 = vpow.pop %v655
        %v657 = vmul.f32 %v637, 1.442695
        %v658 = vpow.pop %v657
        %v659 = vmul.f32 %v638, 1.442695
        %v660 = vpow.pop %v659
        %v661 = vmul.f32 %v639, 1.442695
        %v662 = vpow.pop %v661
        %v663 = vmul.f32 %v640, 1.442695
        %v664 = vpow.pop %v663
        %v665 = vmul.f32 %v641, 1.442695
        %v666 = vpow.pop %v665
        %v667 = vmul.f32 %v642, 1.442695
        %v668 = vpow.pop %v667
        %v669 = vmul.f32 %v643, 1.442695
        %v670 = vpow.pop %v669
        %v671 = vmul.f32 %v644, 1.442695
        %v672 = vpow.pop %v671
        %v673 = vmul.f32 %v645, 1.442695
        %v674 = vpow.pop %v673
        %v675 = vmul.f32 %v646, 1.442695
        %v676 = vpow.pop %v675
        %v677 = vmul.f32 %v647, 1.442695
        %v678 = vpow.pop %v677
        %v679 = vmul.f32 %v648, 1.442695
        %v680 = vpow.pop %v679
        %681 = vadd.xlane.f32.xlu0 %v650
        %v682 = vpop.xlane.xlu0 %681
        %683 = vadd.xlane.f32.xlu0 %v652
        %v684 = vpop.xlane.xlu0 %683
        %685 = vadd.xlane.f32.xlu0 %v654
        %v686 = vpop.xlane.xlu0 %685
        %687 = vadd.xlane.f32.xlu0 %v656
        %v688 = vpop.xlane.xlu0 %687
        %689 = vadd.xlane.f32.xlu0 %v658
        %v690 = vpop.xlane.xlu0 %689
        %691 = vadd.xlane.f32.xlu0 %v660
        %v692 = vpop.xlane.xlu0 %691
        %693 = vadd.xlane.f32.xlu0 %v662
        %v694 = vpop.xlane.xlu0 %693
        %695 = vadd.xlane.f32.xlu0 %v664
        %v696 = vpop.xlane.xlu0 %695
        %697 = vadd.xlane.f32.xlu0 %v666
        %v698 = vpop.xlane.xlu0 %697
        %699 = vadd.xlane.f32.xlu0 %v668
        %v700 = vpop.xlane.xlu0 %699
        %701 = vadd.xlane.f32.xlu0 %v670
        %v702 = vpop.xlane.xlu0 %701
        %703 = vadd.xlane.f32.xlu0 %v672
        %v704 = vpop.xlane.xlu0 %703
        %705 = vadd.xlane.f32.xlu0 %v674
        %v706 = vpop.xlane.xlu0 %705
        %707 = vadd.xlane.f32.xlu0 %v676
        %v708 = vpop.xlane.xlu0 %707
        %709 = vadd.xlane.f32.xlu0 %v678
        %v710 = vpop.xlane.xlu0 %709
        %711 = vadd.xlane.f32.xlu0 %v680
        %v712 = vpop.xlane.xlu0 %711
        %v713 = vadd.f32 %v602, %v682
        %v714 = vadd.f32 %v604, %v684
        %v715 = vadd.f32 %v606, %v686
        %v716 = vadd.f32 %v608, %v688
        %v717 = vadd.f32 %v610, %v690
        %v718 = vadd.f32 %v612, %v692
        %v719 = vadd.f32 %v614, %v694
        %v720 = vadd.f32 %v616, %v696
        %v721 = vadd.f32 %v618, %v698
        %v722 = vadd.f32 %v620, %v700
        %v723 = vadd.f32 %v622, %v702
        %v724 = vadd.f32 %v624, %v704
        %v725 = vadd.f32 %v626, %v706
        %v726 = vadd.f32 %v628, %v708
        %v727 = vadd.f32 %v630, %v710
        %v728 = vadd.f32 %v632, %v712
        %v729 = vlog2.pop %v713
        %v730 = vmul.f32 %v729, 0.6931472
        %v731 = vlog2.pop %v714
        %v732 = vmul.f32 %v731, 0.6931472
        %v733 = vlog2.pop %v715
        %v734 = vmul.f32 %v733, 0.6931472
        %v735 = vlog2.pop %v716
        %v736 = vmul.f32 %v735, 0.6931472
        %v737 = vlog2.pop %v717
        %v738 = vmul.f32 %v737, 0.6931472
        %v739 = vlog2.pop %v718
        %v740 = vmul.f32 %v739, 0.6931472
        %v741 = vlog2.pop %v719
        %v742 = vmul.f32 %v741, 0.6931472
        %v743 = vlog2.pop %v720
        %v744 = vmul.f32 %v743, 0.6931472
        %v745 = vlog2.pop %v721
        %v746 = vmul.f32 %v745, 0.6931472
        %v747 = vlog2.pop %v722
        %v748 = vmul.f32 %v747, 0.6931472
        %v749 = vlog2.pop %v723
        %v750 = vmul.f32 %v749, 0.6931472
        %v751 = vlog2.pop %v724
        %v752 = vmul.f32 %v751, 0.6931472
        %v753 = vlog2.pop %v725
        %v754 = vmul.f32 %v753, 0.6931472
        %v755 = vlog2.pop %v726
        %v756 = vmul.f32 %v755, 0.6931472
        %v757 = vlog2.pop %v727
        %v758 = vmul.f32 %v757, 0.6931472
        %v759 = vlog2.pop %v728
        %v760 = vmul.f32 %v759, 0.6931472
        %v761 = vadd.f32 %v569, %v730
        %v762 = vadd.f32 %v570, %v732
        %v763 = vadd.f32 %v571, %v734
        %v764 = vadd.f32 %v572, %v736
        %v765 = vadd.f32 %v573, %v738
        %v766 = vadd.f32 %v574, %v740
        %v767 = vadd.f32 %v575, %v742
        %v768 = vadd.f32 %v576, %v744
        %v769 = vadd.f32 %v577, %v746
        %v770 = vadd.f32 %v578, %v748
        %v771 = vadd.f32 %v579, %v750
        %v772 = vadd.f32 %v580, %v752
        %v773 = vadd.f32 %v581, %v754
        %v774 = vadd.f32 %v582, %v756
        %v775 = vadd.f32 %v583, %v758
        %v776 = vadd.f32 %v584, %v760
        %v777 = vsub.f32 %v761, %v490
        %v778 = vsub.f32 %v762, %v492
        %v779 = vsub.f32 %v763, %v494
        %v780 = vsub.f32 %v764, %v496
        %v781 = vsub.f32 %v765, %v498
        %v782 = vsub.f32 %v766, %v500
        %v783 = vsub.f32 %v767, %v502
        %v784 = vsub.f32 %v768, %v504
        %v785 = vsub.f32 %v769, %v506
        %v786 = vsub.f32 %v770, %v508
        %v787 = vsub.f32 %v771, %v510
        %v788 = vsub.f32 %v772, %v512
        %v789 = vsub.f32 %v773, %v514
        %v790 = vsub.f32 %v774, %v516
        %v791 = vsub.f32 %v775, %v518
        %v792 = vsub.f32 %v776, %v520
        %793 = vxpose.xlu0.b32.start [1/16] %v777, 128
        %794 = vxpose.xlu0.b32.cont [2/16] %v778, 128
        %795 = vxpose.xlu0.b32.cont [3/16] %v779, 128
        %796 = vxpose.xlu0.b32.cont [4/16] %v780, 128
        %797 = vxpose.xlu0.b32.cont [5/16] %v781, 128
        %798 = vxpose.xlu0.b32.cont [6/16] %v782, 128
        %799 = vxpose.xlu0.b32.cont [7/16] %v783, 128
        %800 = vxpose.xlu0.b32.cont [8/16] %v784, 128
        %801 = vxpose.xlu0.b32.cont [9/16] %v785, 128
        %802 = vxpose.xlu0.b32.cont [10/16] %v786, 128
        %803 = vxpose.xlu0.b32.cont [11/16] %v787, 128
        %804 = vxpose.xlu0.b32.cont [12/16] %v788, 128
        %805 = vxpose.xlu0.b32.cont [13/16] %v789, 128
        %806 = vxpose.xlu0.b32.cont [14/16] %v790, 128
        %807 = vxpose.xlu0.b32.cont [15/16] %v791, 128
        %808 = vxpose.xlu0.b32.end [16/16] %v792, 128
        %v809 = vpop.trf.xlu0
        %v810 = vpop.trf.xlu0
        %v811 = vpop.trf.xlu0
        %v812 = vpop.trf.xlu0
        %v813 = vpop.trf.xlu0
        %v814 = vpop.trf.xlu0
        %v815 = vpop.trf.xlu0
        %v816 = vpop.trf.xlu0
        %v817 = vpop.trf.xlu0
        %v818 = vpop.trf.xlu0
        %v819 = vpop.trf.xlu0
        %v820 = vpop.trf.xlu0
        %v821 = vpop.trf.xlu0
        %v822 = vpop.trf.xlu0
        %v823 = vpop.trf.xlu0
        %v824 = vpop.trf.xlu0
        %825 = vst [vmem:[%s175] sm:$0x1] %v809
        %s826 = sand.u32 %s92, 1
        %s827 = scalar_lea.sflag [#allocation3], %s826
        %s828 = sand.u32 %s92, 1
        %s829 = scalar_lea.vmem [#allocation2], %s828
        // Predicated region
        $region29: #{tpu_custom_call.1} parent=27 // pred_check
          %p830 = pneg %p102
        $region30: #{tpu_custom_call.1} parent=27 // pred_check_branch
          %832 = sbr.rel (%p830) target = $region32
        $region31: #{tpu_custom_call.1} parent=27 // pred_region
          %s833 = sadd.s32 %s20, %s21
          %s835 = ssub.s32 16, 16
          %836 = vsyncadd %s827, %s835
          %s837 = smul.addr %s833, 16
          %s838 = scalar_lea.hbm %s2, %s837
          %s840 = sshll.u32 %s829, 4
          %s841 = int_to_ptr.vmem [resolvable:$true] %s840
          %843 = dma.vmem_to_hbm [thread:$0]  %s841, 16, %s838, %s827
        $region32: #{tpu_custom_call.1} parent=27 // pred_fallthru
          _
      $region28: #{tpu_custom_call.1} parent=5 // pred_fallthru
        _
      %p844 = scmp.le.s32.totalorder 2, %s11
      // Predicated region
      $region33: #{tpu_custom_call.1} parent=5 // pred_check
        %p845 = pneg %p844
      $region34: #{tpu_custom_call.1} parent=5 // pred_check_branch
        %847 = sbr.rel (%p845) target = $region36
      $region35: #{tpu_custom_call.1} parent=5 // pred_region
        %s848 = ssub.s32 %s11, 2
        // Predicated region
        $region37: #{tpu_custom_call.1} parent=35 // pred_check
          %p849 = pneg %p108
        $region38: #{tpu_custom_call.1} parent=35 // pred_check_branch
          %851 = sbr.rel (%p849) target = $region40
        $region39: #{tpu_custom_call.1} parent=35 // pred_region
          %s852 = sand.u32 %s93, 1
          %s853 = scalar_lea.sflag [#allocation3], %s852
          %s854 = sand.u32 %s93, 1
          %s855 = scalar_lea.vmem [#allocation2], %s854
          %856 = dma.done %s853, 16
        $region40: #{tpu_custom_call.1} parent=35 // pred_fallthru
          _
      $region36: #{tpu_custom_call.1} parent=5 // pred_fallthru
        _
    $region6: #{tpu_custom_call.1} parent=1 // loop_footer
      %s15 = sadd.s32 1, %s11
    $region7: #{tpu_custom_call.1} parent=1 // loop_footer_branch
      %10 = sbr.rel target = $region3
    $region8: #{tpu_custom_call.1} parent=1 // loop_exit
      _
    %857 = vsyncpa [#allocation3], 1
    %s858 = scalar_lea.sflag [#allocation3], 1
    %859 = vsyncpa %s858, 1

</llo_original>
